<compile_context>
chip_gen: v6e
topology: v6e:2x2x1
jax: 0.10.0
libtpu: 0.0.40
codegen_flags: <defaults>
</compile_context>

<pallas_src>
import functools

import numpy as np
import jax
import jax.numpy as jnp
from jax.experimental import pallas as pl
from jax.experimental.pallas import tpu as pltpu

EPS = 1e-5
LANE = 128


def _resnet1d_kernel(x_ref, param_ref, aux_ref, out_ref, *, nb, n_valid, use_bf16):
    # x_ref     : (1, Npad)     flattened input (first B*L columns valid, zero pad after)
    # param_ref : (C+1, P)      packed params [w1 | block conv weights | BN | lw (+ lb row)]
    # aux_ref   : (B+3, Npad)   rows 0..B-1: avg-pool matrix; rows B..B+2: prev/valid/next masks
    # out_ref   : (B, F)
    Npad = x_ref.shape[1]
    C = param_ref.shape[0] - 1
    B, F = out_ref.shape
    inv_n = 1.0 / n_valid
    mm_dtype = jnp.bfloat16 if use_bf16 else jnp.float32

    P_all = param_ref[...]
    aux = aux_ref[...]

    # ---- hoisted masks (broadcast ONCE to (C, Npad); reused by every conv) ----
    m_prev1 = aux[B:B + 1, :]        # 0 where (l == 0 within a sequence) or pad column
    m_valid1 = aux[B + 1:B + 2, :]   # 0 on pad columns
    m_next1 = aux[B + 2:B + 3, :]    # 0 where (l == L-1) or pad column
    m_prev = jnp.broadcast_to(m_prev1, (C, Npad))
    m_valid = jnp.broadcast_to(m_valid1, (C, Npad))
    m_next = jnp.broadcast_to(m_next1, (C, Npad))
    pool = aux[0:B, :]               # (B, Npad): 1/L on each row's valid columns, else 0

    # ---- unpack the parameter slab (static column offsets) ----
    w1 = P_all[0:C, 0:3]                                   # stem weight (C, 3)
    blk_off = 3
    bn_off = blk_off + 2 * nb * 3 * C
    lw_off = bn_off + 2 + 4 * nb
    lw = P_all[0:C, lw_off:lw_off + F]                     # linear weight^T (C, F)
    lb = P_all[C:C + 1, lw_off:lw_off + F]                 # linear bias (1, F)

    def bn(h, col, relu):
        # Training-mode BatchNorm1d over (B, L).  Pad columns of h are zero, so plain sums
        # over Npad with inv_n = 1/(B*L) are exact.  Single-pass E[x^2]-E[x]^2 (biased var).
        # TODO(synk): switch to two-pass / shifted sums at production scale.
        gamma = P_all[0:C, bn_off + col:bn_off + col + 1]
        beta = P_all[0:C, bn_off + col + 1:bn_off + col + 2]
        s1 = jnp.sum(h, axis=1, keepdims=True)
        s2 = jnp.sum(h * h, axis=1, keepdims=True)
        mean = s1 * inv_n
        var = s2 * inv_n - mean * mean
        scale = gamma * jax.lax.rsqrt(var + EPS)
        shift = beta - mean * scale
        o = h * scale + shift
        return jnp.maximum(o, 0.0) if relu else o

    def conv3(h, w_packed):
        # Conv1d(C, C, k=3, pad=1) as ONE MXU matmul with contraction depth 3C:
        #   rhs = [mask*h[:, n-1] ; mask*h[:, n] ; mask*h[:, n+1]]   (3C, Npad)
        #   w_packed (C, 3C) with w_packed[co, k*C + ci] = W[co, ci, k]
        prev = pltpu.roll(h, shift=1, axis=1) * m_prev
        ctr = h * m_valid
        nxt = pltpu.roll(h, shift=Npad - 1, axis=1) * m_next
        rhs = jnp.concatenate([prev, ctr, nxt], axis=0)
        return jnp.dot(w_packed.astype(mm_dtype), rhs.astype(mm_dtype),
                       preferred_element_type=jnp.float32)

    # ---- stem: Conv1d(1, C, 3, pad=1) + BN + ReLU ----
    # Cin == 1 -> rank-1 broadcast products on the VPU (K=3 gives the MXU nothing).
    xb = x_ref[...]                                        # (1, Npad), pads already zero
    xp = pltpu.roll(xb, shift=1, axis=1) * m_prev1
    xn = pltpu.roll(xb, shift=Npad - 1, axis=1) * m_next1
    h = w1[:, 0:1] * xp + w1[:, 1:2] * xb + w1[:, 2:3] * xn    # (C, Npad)
    h = bn(h, 0, relu=True)

    # ---- layer1: BasicBlock x nb (static unroll; activations are a few vregs here) ----
    for i in range(nb):
        identity = h
        wa = P_all[0:C, blk_off + (2 * i) * 3 * C: blk_off + (2 * i + 1) * 3 * C]
        wb = P_all[0:C, blk_off + (2 * i + 1) * 3 * C: blk_off + (2 * i + 2) * 3 * C]
        o = bn(conv3(h, wa), 2 + 4 * i, relu=True)
        o = bn(conv3(o, wb), 2 + 4 * i + 2, relu=False)
        h = jnp.maximum(o + identity, 0.0)

    # ---- global average pool (precomputed pool matrix -> MXU) + Linear(C -> F) ----
    pooled = jax.lax.dot_general(pool.astype(mm_dtype), h.astype(mm_dtype),
                                 (((1,), (1,)), ((), ())),
                                 preferred_element_type=jnp.float32)        # (B, C)
    out = jnp.dot(pooled.astype(mm_dtype), lw.astype(mm_dtype),
                  preferred_element_type=jnp.float32) + lb                  # (B, F)
    out_ref[...] = out.astype(out_ref.dtype)


def resnet1d_forward(x, params, *, use_bf16_mxu=False):
    B, L = x.shape
    C = params["conv1_w"].shape[0]
    F = params["lin_w"].shape[0]
    nb = params["blk_convA_w"].shape[0]
    n_valid = B * L
    Npad = ((n_valid + LANE - 1) // LANE) * LANE

    # --- input: channels-first, flattened, zero-padded to a lane-dense multiple of 128 ---
    x_flat = jnp.pad(x.reshape(1, n_valid).astype(jnp.float32),
                     ((0, 0), (0, Npad - n_valid)))

    # --- ONE packed parameter slab (C+1, P) ---
    def pack_taps(w):      # (Cout, Cin, 3) -> (Cout, 3*Cin): column k*Cin + ci = W[co, ci, k]
        co, ci, k = w.shape
        return jnp.transpose(w, (0, 2, 1)).reshape(co, k * ci)

    cols = [pack_taps(params["conv1_w"])]                     # (C, 3)
    for i in range(nb):
        cols.append(pack_taps(params["blk_convA_w"][i]))      # (C, 3C)
        cols.append(pack_taps(params["blk_convB_w"][i]))      # (C, 3C)
    bn_cols = [params["bn1_g"], params["bn1_b"]]
    for i in range(nb):
        bn_cols += [params["blk_bnA_g"][i], params["blk_bnA_b"][i],
                    params["blk_bnB_g"][i], params["blk_bnB_b"][i]]
    cols.append(jnp.stack(bn_cols, axis=1))                   # (C, 2+4nb)
    cols.append(params["lin_w"].T)                            # (C, F)
    slab_top = jnp.concatenate(cols, axis=1).astype(jnp.float32)       # (C, P)
    P = slab_top.shape[1]
    last_row = jnp.zeros((1, P), jnp.float32).at[0, P - F:].set(
        params["lin_b"].astype(jnp.float32))                  # linear bias lives in row C
    param_slab = jnp.concatenate([slab_top, last_row], axis=0)         # (C+1, P)

    # --- aux slab: avg-pool matrix + boundary/pad masks (all static given B, L) ---
    col = np.arange(Npad)
    valid = (col < n_valid)
    pos = col % L
    m_prev = (valid & (pos != 0)).astype(np.float32)
    m_next = (valid & (pos != L - 1)).astype(np.float32)
    pool = np.zeros((B, Npad), np.float32)
    for b in range(B):
        pool[b, b * L:(b + 1) * L] = 1.0 / L
    aux = jnp.asarray(np.concatenate(
        [pool, m_prev[None], valid.astype(np.float32)[None], m_next[None]], axis=0))

    flops = int(2 * 3 * C * Npad                      # stem
                + 2 * nb * 2 * C * 3 * C * Npad       # block convs
                + 2 * B * C * Npad + 2 * B * C * F)   # pool + linear
    bytes_accessed = int(4 * (x_flat.size + param_slab.size + aux.size + B * F))

    kernel = functools.partial(_resnet1d_kernel, nb=nb, n_valid=n_valid,
                               use_bf16=use_bf16_mxu)
    vmem = pl.BlockSpec(memory_space=pltpu.MemorySpace.VMEM)
    return pl.pallas_call(
        kernel,
        out_shape=jax.ShapeDtypeStruct((B, F), jnp.float32),
        in_specs=[vmem, vmem, vmem],
        out_specs=vmem,
        cost_estimate=pl.CostEstimate(flops=flops, transcendentals=0,
                                      bytes_accessed=bytes_accessed),
    )(x_flat, param_slab, aux)


def reference_forward(x, params):
    """Pure-JAX (XLA) reference with PyTorch-layout weights, for validation."""
    def conv1d(h, w):
        return jax.lax.conv_general_dilated(
            h, w, window_strides=(1,), padding=((1, 1),),
            dimension_numbers=("NCH", "OIH", "NCH"))

    def bn(h, g, b):
        mean = h.mean(axis=(0, 2), keepdims=True)
        var = ((h - mean) ** 2).mean(axis=(0, 2), keepdims=True)
        return (h - mean) / jnp.sqrt(var + EPS) * g.reshape(1, -1, 1) + b.reshape(1, -1, 1)

    h = x[:, None, :]
    h = jax.nn.relu(bn(conv1d(h, params["conv1_w"]), params["bn1_g"], params["bn1_b"]))
    nb = params["blk_convA_w"].shape[0]
    for i in range(nb):
        idn = h
        o = jax.nn.relu(bn(conv1d(h, params["blk_convA_w"][i]),
                           params["blk_bnA_g"][i], params["blk_bnA_b"][i]))
        o = bn(conv1d(o, params["blk_convB_w"][i]),
               params["blk_bnB_g"][i], params["blk_bnB_b"][i])
        h = jax.nn.relu(o + idn)
    pooled = h.mean(axis=2)
    return pooled @ params["lin_w"].T + params["lin_b"]


def init_params(key, C=16, num_features=16, num_blocks=2):
    """Deterministic init matching the module: kaiming_normal_ (fan_in, gain=sqrt(2))
    on conv/linear weights, BN gamma=1/beta=0, default Linear bias init."""
    ks = iter(jax.random.split(key, 4 + 2 * num_blocks))

    def kaiming(k, shape, fan_in):
        return (jax.random.normal(k, shape) * np.sqrt(2.0 / fan_in)).astype(jnp.float32)

    p = {}
    p["conv1_w"] = kaiming(next(ks), (C, 1, 3), 1 * 3)
    p["bn1_g"] = jnp.ones((C,), jnp.float32)
    p["bn1_b"] = jnp.zeros((C,), jnp.float32)
    wa, wb = [], []
    for _ in range(num_blocks):
        wa.append(kaiming(next(ks), (C, C, 3), C * 3))
        wb.append(kaiming(next(ks), (C, C, 3), C * 3))
    p["blk_convA_w"] = jnp.stack(wa)
    p["blk_convB_w"] = jnp.stack(wb)
    p["blk_bnA_g"] = jnp.ones((num_blocks, C), jnp.float32)
    p["blk_bnA_b"] = jnp.zeros((num_blocks, C), jnp.float32)
    p["blk_bnB_g"] = jnp.ones((num_blocks, C), jnp.float32)
    p["blk_bnB_b"] = jnp.zeros((num_blocks, C), jnp.float32)
    p["lin_w"] = kaiming(next(ks), (num_features, C), C)
    bound = 1.0 / np.sqrt(C)
    p["lin_b"] = jax.random.uniform(next(ks), (num_features,), jnp.float32, -bound, bound)
    return p


if __name__ == "__main__":
    key = jax.random.PRNGKey(0)
    kx, kp = jax.random.split(key)
    B, dim = 4, 16                       # x: (batch, dim) as in the PyTorch forward
    x = jax.random.normal(kx, (B, dim), jnp.float32)
    params = init_params(kp, C=16, num_features=16, num_blocks=2)

    ref = reference_forward(x, params)

    # f32-MXU path (the sensible mode at these tiny shapes): strict check.
    out = jax.block_until_ready(resnet1d_forward(x, params, use_bf16_mxu=False))
    np.testing.assert_allclose(np.asarray(out), np.asarray(ref), rtol=1e-4, atol=1e-4)

    # bf16-MXU path (production lever for v6e/v7x): loose smoke-check against f32 reference.
    out_bf16 = jax.block_until_ready(resnet1d_forward(x, params, use_bf16_mxu=True))
    np.testing.assert_allclose(np.asarray(out_bf16), np.asarray(ref), rtol=1e-1, atol=1e-1)

    print("KERNEL_OK")
</pallas_src>

<mosaic_0001>
module attributes {stable_mosaic.version = 11 : i64} {
  func.func @_resnet1d_kernel(%arg0: memref<1x128xf32, #tpu.memory_space<vmem>>, %arg1: memref<17x221xf32, #tpu.memory_space<vmem>>, %arg2: memref<7x128xf32, #tpu.memory_space<vmem>>, %arg3: memref<4x16xf32, #tpu.memory_space<vmem>>) attributes {dimension_semantics = [], scalar_prefetch = 0 : i64, scratch_operands = 0 : i64, tpu.core_type = #tpu.core_type<tc>} {
    %c0 = arith.constant 0 : index
    %c0_0 = arith.constant 0 : index
    %0 = vector.load %arg1[%c0, %c0_0] : memref<17x221xf32, #tpu.memory_space<vmem>>, vector<17x221xf32>
    %c0_1 = arith.constant 0 : index
    %c0_2 = arith.constant 0 : index
    %1 = vector.load %arg2[%c0_1, %c0_2] : memref<7x128xf32, #tpu.memory_space<vmem>>, vector<7x128xf32>
    %2 = vector.extract_strided_slice %1 {offsets = [4, 0], sizes = [1, 128], strides = [1, 1]} : vector<7x128xf32> to vector<1x128xf32>
    %3 = vector.extract_strided_slice %1 {offsets = [5, 0], sizes = [1, 128], strides = [1, 1]} : vector<7x128xf32> to vector<1x128xf32>
    %4 = vector.extract_strided_slice %1 {offsets = [6, 0], sizes = [1, 128], strides = [1, 1]} : vector<7x128xf32> to vector<1x128xf32>
    %5 = vector.shape_cast %2 : vector<1x128xf32> to vector<1x128xf32>
    %6 = vector.broadcast %5 : vector<1x128xf32> to vector<16x128xf32>
    %7 = vector.shape_cast %3 : vector<1x128xf32> to vector<1x128xf32>
    %8 = vector.broadcast %7 : vector<1x128xf32> to vector<16x128xf32>
    %9 = vector.shape_cast %4 : vector<1x128xf32> to vector<1x128xf32>
    %10 = vector.broadcast %9 : vector<1x128xf32> to vector<16x128xf32>
    %11 = vector.extract_strided_slice %1 {offsets = [0, 0], sizes = [4, 128], strides = [1, 1]} : vector<7x128xf32> to vector<4x128xf32>
    %12 = vector.extract_strided_slice %0 {offsets = [0, 0], sizes = [16, 3], strides = [1, 1]} : vector<17x221xf32> to vector<16x3xf32>
    %13 = vector.extract_strided_slice %0 {offsets = [0, 205], sizes = [16, 16], strides = [1, 1]} : vector<17x221xf32> to vector<16x16xf32>
    %14 = vector.extract_strided_slice %0 {offsets = [16, 205], sizes = [1, 16], strides = [1, 1]} : vector<17x221xf32> to vector<1x16xf32>
    %c0_3 = arith.constant 0 : index
    %c0_4 = arith.constant 0 : index
    %15 = vector.load %arg0[%c0_3, %c0_4] : memref<1x128xf32, #tpu.memory_space<vmem>>, vector<1x128xf32>
    %c1_i32 = arith.constant 1 : i32
    %16 = tpu.dynamic_rotate %15 by %c1_i32 dim 1 : vector<1x128xf32>, i32 -> vector<1x128xf32>
    %17 = arith.mulf %16, %2 : vector<1x128xf32>
    %c127_i32 = arith.constant 127 : i32
    %18 = tpu.dynamic_rotate %15 by %c127_i32 dim 1 : vector<1x128xf32>, i32 -> vector<1x128xf32>
    %19 = arith.mulf %18, %4 : vector<1x128xf32>
    %20 = vector.extract_strided_slice %12 {offsets = [0, 0], sizes = [16, 1], strides = [1, 1]} : vector<16x3xf32> to vector<16x1xf32>
    %21 = vector.broadcast %20 : vector<16x1xf32> to vector<16x128xf32>
    %22 = vector.broadcast %17 : vector<1x128xf32> to vector<16x128xf32>
    %23 = arith.mulf %21, %22 : vector<16x128xf32>
    %24 = vector.extract_strided_slice %12 {offsets = [0, 1], sizes = [16, 1], strides = [1, 1]} : vector<16x3xf32> to vector<16x1xf32>
    %25 = vector.broadcast %24 : vector<16x1xf32> to vector<16x128xf32>
    %26 = vector.broadcast %15 : vector<1x128xf32> to vector<16x128xf32>
    %27 = arith.mulf %25, %26 : vector<16x128xf32>
    %28 = arith.addf %23, %27 : vector<16x128xf32>
    %29 = vector.extract_strided_slice %12 {offsets = [0, 2], sizes = [16, 1], strides = [1, 1]} : vector<16x3xf32> to vector<16x1xf32>
    %30 = vector.broadcast %29 : vector<16x1xf32> to vector<16x128xf32>
    %31 = vector.broadcast %19 : vector<1x128xf32> to vector<16x128xf32>
    %32 = arith.mulf %30, %31 : vector<16x128xf32>
    %33 = arith.addf %28, %32 : vector<16x128xf32>
    %34 = vector.extract_strided_slice %0 {offsets = [0, 195], sizes = [16, 1], strides = [1, 1]} : vector<17x221xf32> to vector<16x1xf32>
    %35 = vector.extract_strided_slice %0 {offsets = [0, 196], sizes = [16, 1], strides = [1, 1]} : vector<17x221xf32> to vector<16x1xf32>
    %cst = arith.constant dense<0.000000e+00> : vector<16xf32>
    %36 = vector.multi_reduction <add>, %33, %cst [1] : vector<16x128xf32> to vector<16xf32>
    %37 = vector.shape_cast %36 : vector<16xf32> to vector<16x1xf32>
    %38 = arith.mulf %33, %33 : vector<16x128xf32>
    %cst_5 = arith.constant dense<0.000000e+00> : vector<16xf32>
    %39 = vector.multi_reduction <add>, %38, %cst_5 [1] : vector<16x128xf32> to vector<16xf32>
    %40 = vector.shape_cast %39 : vector<16xf32> to vector<16x1xf32>
    %cst_6 = arith.constant 1.562500e-02 : f32
    %41 = vector.broadcast %cst_6 : f32 to vector<16x1xf32>
    %42 = arith.mulf %37, %41 : vector<16x1xf32>
    %cst_7 = arith.constant 1.562500e-02 : f32
    %43 = vector.broadcast %cst_7 : f32 to vector<16x1xf32>
    %44 = arith.mulf %40, %43 : vector<16x1xf32>
    %45 = arith.mulf %42, %42 : vector<16x1xf32>
    %46 = arith.subf %44, %45 : vector<16x1xf32>
    %cst_8 = arith.constant 9.99999974E-6 : f32
    %47 = vector.broadcast %cst_8 : f32 to vector<16x1xf32>
    %48 = arith.addf %46, %47 : vector<16x1xf32>
    %49 = math.rsqrt %48 : vector<16x1xf32>
    %50 = arith.mulf %34, %49 : vector<16x1xf32>
    %51 = arith.mulf %42, %50 : vector<16x1xf32>
    %52 = arith.subf %35, %51 : vector<16x1xf32>
    %53 = vector.broadcast %50 : vector<16x1xf32> to vector<16x128xf32>
    %54 = arith.mulf %33, %53 : vector<16x128xf32>
    %55 = vector.broadcast %52 : vector<16x1xf32> to vector<16x128xf32>
    %56 = arith.addf %54, %55 : vector<16x128xf32>
    %cst_9 = arith.constant 0.000000e+00 : f32
    %57 = vector.broadcast %cst_9 : f32 to vector<16x128xf32>
    %58 = arith.maximumf %56, %57 : vector<16x128xf32>
    %59 = vector.extract_strided_slice %0 {offsets = [0, 3], sizes = [16, 48], strides = [1, 1]} : vector<17x221xf32> to vector<16x48xf32>
    %60 = vector.extract_strided_slice %0 {offsets = [0, 51], sizes = [16, 48], strides = [1, 1]} : vector<17x221xf32> to vector<16x48xf32>
    %c1_i32_10 = arith.constant 1 : i32
    %61 = tpu.dynamic_rotate %58 by %c1_i32_10 dim 1 : vector<16x128xf32>, i32 -> vector<16x128xf32>
    %62 = arith.mulf %61, %6 : vector<16x128xf32>
    %63 = arith.mulf %58, %8 : vector<16x128xf32>
    %c127_i32_11 = arith.constant 127 : i32
    %64 = tpu.dynamic_rotate %58 by %c127_i32_11 dim 1 : vector<16x128xf32>, i32 -> vector<16x128xf32>
    %65 = arith.mulf %64, %10 : vector<16x128xf32>
    %66 = tpu.concatenate %62, %63, %65 in 0 : vector<16x128xf32>, vector<16x128xf32>, vector<16x128xf32> -> vector<48x128xf32>
    %cst_12 = arith.constant dense<0.000000e+00> : vector<16x128xf32>
    %67 = tpu.matmul %59, %66, %cst_12 {dimension_numbers = #tpu.dot_dimension_numbers<[1], [0], [0], [1], [0, 0, 1, 1], [], []>} : vector<16x48xf32>, vector<48x128xf32>, vector<16x128xf32> -> vector<16x128xf32>
    %68 = vector.extract_strided_slice %0 {offsets = [0, 197], sizes = [16, 1], strides = [1, 1]} : vector<17x221xf32> to vector<16x1xf32>
    %69 = vector.extract_strided_slice %0 {offsets = [0, 198], sizes = [16, 1], strides = [1, 1]} : vector<17x221xf32> to vector<16x1xf32>
    %cst_13 = arith.constant dense<0.000000e+00> : vector<16xf32>
    %70 = vector.multi_reduction <add>, %67, %cst_13 [1] : vector<16x128xf32> to vector<16xf32>
    %71 = vector.shape_cast %70 : vector<16xf32> to vector<16x1xf32>
    %72 = arith.mulf %67, %67 : vector<16x128xf32>
    %cst_14 = arith.constant dense<0.000000e+00> : vector<16xf32>
    %73 = vector.multi_reduction <add>, %72, %cst_14 [1] : vector<16x128xf32> to vector<16xf32>
    %74 = vector.shape_cast %73 : vector<16xf32> to vector<16x1xf32>
    %cst_15 = arith.constant 1.562500e-02 : f32
    %75 = vector.broadcast %cst_15 : f32 to vector<16x1xf32>
    %76 = arith.mulf %71, %75 : vector<16x1xf32>
    %cst_16 = arith.constant 1.562500e-02 : f32
    %77 = vector.broadcast %cst_16 : f32 to vector<16x1xf32>
    %78 = arith.mulf %74, %77 : vector<16x1xf32>
    %79 = arith.mulf %76, %76 : vector<16x1xf32>
    %80 = arith.subf %78, %79 : vector<16x1xf32>
    %cst_17 = arith.constant 9.99999974E-6 : f32
    %81 = vector.broadcast %cst_17 : f32 to vector<16x1xf32>
    %82 = arith.addf %80, %81 : vector<16x1xf32>
    %83 = math.rsqrt %82 : vector<16x1xf32>
    %84 = arith.mulf %68, %83 : vector<16x1xf32>
    %85 = arith.mulf %76, %84 : vector<16x1xf32>
    %86 = arith.subf %69, %85 : vector<16x1xf32>
    %87 = vector.broadcast %84 : vector<16x1xf32> to vector<16x128xf32>
    %88 = arith.mulf %67, %87 : vector<16x128xf32>
    %89 = vector.broadcast %86 : vector<16x1xf32> to vector<16x128xf32>
    %90 = arith.addf %88, %89 : vector<16x128xf32>
    %cst_18 = arith.constant 0.000000e+00 : f32
    %91 = vector.broadcast %cst_18 : f32 to vector<16x128xf32>
    %92 = arith.maximumf %90, %91 : vector<16x128xf32>
    %c1_i32_19 = arith.constant 1 : i32
    %93 = tpu.dynamic_rotate %92 by %c1_i32_19 dim 1 : vector<16x128xf32>, i32 -> vector<16x128xf32>
    %94 = arith.mulf %93, %6 : vector<16x128xf32>
    %95 = arith.mulf %92, %8 : vector<16x128xf32>
    %c127_i32_20 = arith.constant 127 : i32
    %96 = tpu.dynamic_rotate %92 by %c127_i32_20 dim 1 : vector<16x128xf32>, i32 -> vector<16x128xf32>
    %97 = arith.mulf %96, %10 : vector<16x128xf32>
    %98 = tpu.concatenate %94, %95, %97 in 0 : vector<16x128xf32>, vector<16x128xf32>, vector<16x128xf32> -> vector<48x128xf32>
    %cst_21 = arith.constant dense<0.000000e+00> : vector<16x128xf32>
    %99 = tpu.matmul %60, %98, %cst_21 {dimension_numbers = #tpu.dot_dimension_numbers<[1], [0], [0], [1], [0, 0, 1, 1], [], []>} : vector<16x48xf32>, vector<48x128xf32>, vector<16x128xf32> -> vector<16x128xf32>
    %100 = vector.extract_strided_slice %0 {offsets = [0, 199], sizes = [16, 1], strides = [1, 1]} : vector<17x221xf32> to vector<16x1xf32>
    %101 = vector.extract_strided_slice %0 {offsets = [0, 200], sizes = [16, 1], strides = [1, 1]} : vector<17x221xf32> to vector<16x1xf32>
    %cst_22 = arith.constant dense<0.000000e+00> : vector<16xf32>
    %102 = vector.multi_reduction <add>, %99, %cst_22 [1] : vector<16x128xf32> to vector<16xf32>
    %103 = vector.shape_cast %102 : vector<16xf32> to vector<16x1xf32>
    %104 = arith.mulf %99, %99 : vector<16x128xf32>
    %cst_23 = arith.constant dense<0.000000e+00> : vector<16xf32>
    %105 = vector.multi_reduction <add>, %104, %cst_23 [1] : vector<16x128xf32> to vector<16xf32>
    %106 = vector.shape_cast %105 : vector<16xf32> to vector<16x1xf32>
    %cst_24 = arith.constant 1.562500e-02 : f32
    %107 = vector.broadcast %cst_24 : f32 to vector<16x1xf32>
    %108 = arith.mulf %103, %107 : vector<16x1xf32>
    %cst_25 = arith.constant 1.562500e-02 : f32
    %109 = vector.broadcast %cst_25 : f32 to vector<16x1xf32>
    %110 = arith.mulf %106, %109 : vector<16x1xf32>
    %111 = arith.mulf %108, %108 : vector<16x1xf32>
    %112 = arith.subf %110, %111 : vector<16x1xf32>
    %cst_26 = arith.constant 9.99999974E-6 : f32
    %113 = vector.broadcast %cst_26 : f32 to vector<16x1xf32>
    %114 = arith.addf %112, %113 : vector<16x1xf32>
    %115 = math.rsqrt %114 : vector<16x1xf32>
    %116 = arith.mulf %100, %115 : vector<16x1xf32>
    %117 = arith.mulf %108, %116 : vector<16x1xf32>
    %118 = arith.subf %101, %117 : vector<16x1xf32>
    %119 = vector.broadcast %116 : vector<16x1xf32> to vector<16x128xf32>
    %120 = arith.mulf %99, %119 : vector<16x128xf32>
    %121 = vector.broadcast %118 : vector<16x1xf32> to vector<16x128xf32>
    %122 = arith.addf %120, %121 : vector<16x128xf32>
    %123 = arith.addf %122, %58 : vector<16x128xf32>
    %cst_27 = arith.constant 0.000000e+00 : f32
    %124 = vector.broadcast %cst_27 : f32 to vector<16x128xf32>
    %125 = arith.maximumf %123, %124 : vector<16x128xf32>
    %126 = vector.extract_strided_slice %0 {offsets = [0, 99], sizes = [16, 48], strides = [1, 1]} : vector<17x221xf32> to vector<16x48xf32>
    %127 = vector.extract_strided_slice %0 {offsets = [0, 147], sizes = [16, 48], strides = [1, 1]} : vector<17x221xf32> to vector<16x48xf32>
    %c1_i32_28 = arith.constant 1 : i32
    %128 = tpu.dynamic_rotate %125 by %c1_i32_28 dim 1 : vector<16x128xf32>, i32 -> vector<16x128xf32>
    %129 = arith.mulf %128, %6 : vector<16x128xf32>
    %130 = arith.mulf %125, %8 : vector<16x128xf32>
    %c127_i32_29 = arith.constant 127 : i32
    %131 = tpu.dynamic_rotate %125 by %c127_i32_29 dim 1 : vector<16x128xf32>, i32 -> vector<16x128xf32>
    %132 = arith.mulf %131, %10 : vector<16x128xf32>
    %133 = tpu.concatenate %129, %130, %132 in 0 : vector<16x128xf32>, vector<16x128xf32>, vector<16x128xf32> -> vector<48x128xf32>
    %cst_30 = arith.constant dense<0.000000e+00> : vector<16x128xf32>
    %134 = tpu.matmul %126, %133, %cst_30 {dimension_numbers = #tpu.dot_dimension_numbers<[1], [0], [0], [1], [0, 0, 1, 1], [], []>} : vector<16x48xf32>, vector<48x128xf32>, vector<16x128xf32> -> vector<16x128xf32>
    %135 = vector.extract_strided_slice %0 {offsets = [0, 201], sizes = [16, 1], strides = [1, 1]} : vector<17x221xf32> to vector<16x1xf32>
    %136 = vector.extract_strided_slice %0 {offsets = [0, 202], sizes = [16, 1], strides = [1, 1]} : vector<17x221xf32> to vector<16x1xf32>
    %cst_31 = arith.constant dense<0.000000e+00> : vector<16xf32>
    %137 = vector.multi_reduction <add>, %134, %cst_31 [1] : vector<16x128xf32> to vector<16xf32>
    %138 = vector.shape_cast %137 : vector<16xf32> to vector<16x1xf32>
    %139 = arith.mulf %134, %134 : vector<16x128xf32>
    %cst_32 = arith.constant dense<0.000000e+00> : vector<16xf32>
    %140 = vector.multi_reduction <add>, %139, %cst_32 [1] : vector<16x128xf32> to vector<16xf32>
    %141 = vector.shape_cast %140 : vector<16xf32> to vector<16x1xf32>
    %cst_33 = arith.constant 1.562500e-02 : f32
    %142 = vector.broadcast %cst_33 : f32 to vector<16x1xf32>
    %143 = arith.mulf %138, %142 : vector<16x1xf32>
    %cst_34 = arith.constant 1.562500e-02 : f32
    %144 = vector.broadcast %cst_34 : f32 to vector<16x1xf32>
    %145 = arith.mulf %141, %144 : vector<16x1xf32>
    %146 = arith.mulf %143, %143 : vector<16x1xf32>
    %147 = arith.subf %145, %146 : vector<16x1xf32>
    %cst_35 = arith.constant 9.99999974E-6 : f32
    %148 = vector.broadcast %cst_35 : f32 to vector<16x1xf32>
    %149 = arith.addf %147, %148 : vector<16x1xf32>
    %150 = math.rsqrt %149 : vector<16x1xf32>
    %151 = arith.mulf %135, %150 : vector<16x1xf32>
    %152 = arith.mulf %143, %151 : vector<16x1xf32>
    %153 = arith.subf %136, %152 : vector<16x1xf32>
    %154 = vector.broadcast %151 : vector<16x1xf32> to vector<16x128xf32>
    %155 = arith.mulf %134, %154 : vector<16x128xf32>
    %156 = vector.broadcast %153 : vector<16x1xf32> to vector<16x128xf32>
    %157 = arith.addf %155, %156 : vector<16x128xf32>
    %cst_36 = arith.constant 0.000000e+00 : f32
    %158 = vector.broadcast %cst_36 : f32 to vector<16x128xf32>
    %159 = arith.maximumf %157, %158 : vector<16x128xf32>
    %c1_i32_37 = arith.constant 1 : i32
    %160 = tpu.dynamic_rotate %159 by %c1_i32_37 dim 1 : vector<16x128xf32>, i32 -> vector<16x128xf32>
    %161 = arith.mulf %160, %6 : vector<16x128xf32>
    %162 = arith.mulf %159, %8 : vector<16x128xf32>
    %c127_i32_38 = arith.constant 127 : i32
    %163 = tpu.dynamic_rotate %159 by %c127_i32_38 dim 1 : vector<16x128xf32>, i32 -> vector<16x128xf32>
    %164 = arith.mulf %163, %10 : vector<16x128xf32>
    %165 = tpu.concatenate %161, %162, %164 in 0 : vector<16x128xf32>, vector<16x128xf32>, vector<16x128xf32> -> vector<48x128xf32>
    %cst_39 = arith.constant dense<0.000000e+00> : vector<16x128xf32>
    %166 = tpu.matmul %127, %165, %cst_39 {dimension_numbers = #tpu.dot_dimension_numbers<[1], [0], [0], [1], [0, 0, 1, 1], [], []>} : vector<16x48xf32>, vector<48x128xf32>, vector<16x128xf32> -> vector<16x128xf32>
    %167 = vector.extract_strided_slice %0 {offsets = [0, 203], sizes = [16, 1], strides = [1, 1]} : vector<17x221xf32> to vector<16x1xf32>
    %168 = vector.extract_strided_slice %0 {offsets = [0, 204], sizes = [16, 1], strides = [1, 1]} : vector<17x221xf32> to vector<16x1xf32>
    %cst_40 = arith.constant dense<0.000000e+00> : vector<16xf32>
    %169 = vector.multi_reduction <add>, %166, %cst_40 [1] : vector<16x128xf32> to vector<16xf32>
    %170 = vector.shape_cast %169 : vector<16xf32> to vector<16x1xf32>
    %171 = arith.mulf %166, %166 : vector<16x128xf32>
    %cst_41 = arith.constant dense<0.000000e+00> : vector<16xf32>
    %172 = vector.multi_reduction <add>, %171, %cst_41 [1] : vector<16x128xf32> to vector<16xf32>
    %173 = vector.shape_cast %172 : vector<16xf32> to vector<16x1xf32>
    %cst_42 = arith.constant 1.562500e-02 : f32
    %174 = vector.broadcast %cst_42 : f32 to vector<16x1xf32>
    %175 = arith.mulf %170, %174 : vector<16x1xf32>
    %cst_43 = arith.constant 1.562500e-02 : f32
    %176 = vector.broadcast %cst_43 : f32 to vector<16x1xf32>
    %177 = arith.mulf %173, %176 : vector<16x1xf32>
    %178 = arith.mulf %175, %175 : vector<16x1xf32>
    %179 = arith.subf %177, %178 : vector<16x1xf32>
    %cst_44 = arith.constant 9.99999974E-6 : f32
    %180 = vector.broadcast %cst_44 : f32 to vector<16x1xf32>
    %181 = arith.addf %179, %180 : vector<16x1xf32>
    %182 = math.rsqrt %181 : vector<16x1xf32>
    %183 = arith.mulf %167, %182 : vector<16x1xf32>
    %184 = arith.mulf %175, %183 : vector<16x1xf32>
    %185 = arith.subf %168, %184 : vector<16x1xf32>
    %186 = vector.broadcast %183 : vector<16x1xf32> to vector<16x128xf32>
    %187 = arith.mulf %166, %186 : vector<16x128xf32>
    %188 = vector.broadcast %185 : vector<16x1xf32> to vector<16x128xf32>
    %189 = arith.addf %187, %188 : vector<16x128xf32>
    %190 = arith.addf %189, %125 : vector<16x128xf32>
    %cst_45 = arith.constant 0.000000e+00 : f32
    %191 = vector.broadcast %cst_45 : f32 to vector<16x128xf32>
    %192 = arith.maximumf %190, %191 : vector<16x128xf32>
    %cst_46 = arith.constant dense<0.000000e+00> : vector<4x16xf32>
    %193 = tpu.matmul %11, %192, %cst_46 {dimension_numbers = #tpu.dot_dimension_numbers<[1], [1], [0], [0], [0, 0, 1, 0], [], []>} : vector<4x128xf32>, vector<16x128xf32>, vector<4x16xf32> -> vector<4x16xf32>
    %cst_47 = arith.constant dense<0.000000e+00> : vector<4x16xf32>
    %194 = tpu.matmul %193, %13, %cst_47 {dimension_numbers = #tpu.dot_dimension_numbers<[1], [0], [0], [1], [0, 0, 1, 1], [], []>} : vector<4x16xf32>, vector<16x16xf32>, vector<4x16xf32> -> vector<4x16xf32>
    %195 = vector.broadcast %14 : vector<1x16xf32> to vector<4x16xf32>
    %196 = arith.addf %194, %195 : vector<4x16xf32>
    %c0_48 = arith.constant 0 : index
    %c0_49 = arith.constant 0 : index
    %197 = vector.load %arg3[%c0_48, %c0_49] : memref<4x16xf32, #tpu.memory_space<vmem>>, vector<4x16xf32>
    tpu.vector_store %arg3[%c0_48, %c0_49], %196 {strides = array<i32>} : memref<4x16xf32, #tpu.memory_space<vmem>>, vector<4x16xf32>,
    return
  }
}

</mosaic_0001>

<llo_original>
// kernel: tpu_custom_call.1
$region0: #{tpu_custom_call.1}
  #allocation0 [shape = 'u32[]', space=smem, size = 0x4, offset = 0x4, fixed_abs, tag = 'smem constant byte address 0x4 - core index']
  #allocation1 [shape = 'u32[144,128]{1,0:T(1,128)}', space=vmem, size = 0x12000, scoped, tag = 'internal scratch']
  %s0 = inlined_call_operand.hbm [shape: f32[1,128], index: 0, kind: input, shape index: {}]
  %s1 = inlined_call_operand.hbm [shape: f32[17,221], index: 1, kind: input, shape index: {}]
  %s2 = inlined_call_operand.hbm [shape: f32[7,128], index: 2, kind: input, shape index: {}]
  %s3 = inlined_call_operand.hbm [shape: f32[4,16], index: 3, kind: output, shape index: {}]
  %s4 = sld [smem:[#allocation0]]
  $region34: #{tpu_custom_call.1} parent=0
    _
  %s6 = ssub.s32 1, %s4
  %s7 = scalar_select 0, %s6, %s4
  $region1: #{tpu_custom_call.1} parent=0
    #allocation2 [shape = 'u8[512]{0}', space=vmem, size = 0x400, scoped, tag = 'input window, operand 0, single buffered']
    #allocation3 [shape = 's32[1]{0}', space=sflag, size = 0x4, scoped, tag = 'scoped memory for tpu_custom_call.1']
    #allocation4 [shape = 's32[1]{0}', space=sflag, size = 0x4, scoped, tag = 'scoped memory for tpu_custom_call.1']
    #allocation5 [shape = 'u8[24576]{0}', space=vmem, size = 0x6000, scoped, tag = 'input window, operand 1, single buffered']
    #allocation6 [shape = 's32[1]{0}', space=sflag, size = 0x4, scoped, tag = 'scoped memory for tpu_custom_call.1']
    #allocation7 [shape = 'u8[4096]{0}', space=vmem, size = 0x1000, scoped, tag = 'input window, operand 2, single buffered']
    #allocation8 [shape = 'u8[2048]{0}', space=vmem, size = 0x800, scoped, tag = 'output window, operand 0, single buffered']
    %8 = vsyncpa [#allocation3], 0
    %9 = vsyncpa [#allocation6], 0
    %10 = vsyncpa [#allocation4], 0
    // Predicated region
    $region2: #{tpu_custom_call.1} parent=1 // pred_check
      _
    $region3: #{tpu_custom_call.1} parent=1 // pred_check_branch
      %12 = sbr.rel (0) target = $region5
    $region4: #{tpu_custom_call.1} parent=1 // pred_region
      %s14 = ssub.s32 16, 16
      %15 = vsyncadd [#allocation3], %s14
      %s17 = sshll.u32 [#allocation2], 4
      %s18 = int_to_ptr.vmem [resolvable:$true] %s17
      %20 = dma.hbm_to_vmem [thread:$0]  %s0, 16, %s18, [#allocation3]
    $region5: #{tpu_custom_call.1} parent=1 // pred_fallthru
      _
    // Predicated region
    $region6: #{tpu_custom_call.1} parent=1 // pred_check
      _
    $region7: #{tpu_custom_call.1} parent=1 // pred_check_branch
      %22 = sbr.rel (0) target = $region9
    $region8: #{tpu_custom_call.1} parent=1 // pred_region
      %s24 = ssub.s32 768, 768
      %25 = vsyncadd [#allocation6], %s24
      %s26 = sshll.u32 [#allocation5], 4
      %s27 = int_to_ptr.vmem [resolvable:$true] %s26
      %32 = dma.hbm_to_vmem [thread:$0]  %s1, 768, %s27, [#allocation6], 256, 256, 16
    $region9: #{tpu_custom_call.1} parent=1 // pred_fallthru
      _
    // Predicated region
    $region10: #{tpu_custom_call.1} parent=1 // pred_check
      _
    $region11: #{tpu_custom_call.1} parent=1 // pred_check_branch
      %34 = sbr.rel (0) target = $region13
    $region12: #{tpu_custom_call.1} parent=1 // pred_region
      %s36 = ssub.s32 128, 128
      %37 = vsyncadd [#allocation6], %s36
      %s39 = sshll.u32 [#allocation7], 4
      %s40 = int_to_ptr.vmem [resolvable:$true] %s39
      %42 = dma.hbm_to_vmem [thread:$0]  %s2, 128, %s40, [#allocation6]
    $region13: #{tpu_custom_call.1} parent=1 // pred_fallthru
      _
    // Predicated region
    $region14: #{tpu_custom_call.1} parent=1 // pred_check
      _
    $region15: #{tpu_custom_call.1} parent=1 // pred_check_branch
      %44 = sbr.rel (0) target = $region17
    $region16: #{tpu_custom_call.1} parent=1 // pred_region
      %45 = dma.done [#allocation3], 16
    $region17: #{tpu_custom_call.1} parent=1 // pred_fallthru
      _
    // Predicated region
    $region18: #{tpu_custom_call.1} parent=1 // pred_check
      _
    $region19: #{tpu_custom_call.1} parent=1 // pred_check_branch
      %47 = sbr.rel (0) target = $region21
    $region20: #{tpu_custom_call.1} parent=1 // pred_region
      %48 = dma.done [#allocation6], 768
    $region21: #{tpu_custom_call.1} parent=1 // pred_fallthru
      _
    // Predicated region
    $region22: #{tpu_custom_call.1} parent=1 // pred_check
      _
    $region23: #{tpu_custom_call.1} parent=1 // pred_check_branch
      %50 = sbr.rel (0) target = $region25
    $region24: #{tpu_custom_call.1} parent=1 // pred_region
      %51 = dma.done [#allocation6], 128
    $region25: #{tpu_custom_call.1} parent=1 // pred_fallthru
      _
    %v52 = vld [vmem:[#allocation5] sm:$0xff]
    %v53 = vld [vmem:[#allocation5 + $0x8] sm:$0xff]
    %v54 = vld [vmem:[#allocation5 + $0x10] sm:$0xff]
    %v55 = vld [vmem:[#allocation5 + $0x18] sm:$0xff]
    %v56 = vld [vmem:[#allocation5 + $0x28] sm:$0x1]
    %v57 = vld [vmem:[#allocation7] sm:$0x7f]
    %v58 = vlaneseq
    %v59 = vshrl.u32 %v58, 7
    %v60 = vsub.s32 4, %v59
    %v61 = vrot.slane %v57, %v60
    %v62 = vlaneseq
    %v63 = vshrl.u32 %v62, 7
    %v64 = vsub.s32 5, %v63
    %v65 = vrot.slane %v57, %v64
    %v66 = vlaneseq
    %v67 = vshrl.u32 %v66, 7
    %v68 = vsub.s32 6, %v67
    %v69 = vrot.slane %v57, %v68
    %v70 = vld [vmem:[#allocation2] sm:$0x1]
    %71 = vrot.lane.b32.xlu0 %v70, 1
    %v72 = vpop.permute.xlu0 %71
    %v74 = vrot.slane %v57, 4
    %v76 = vmul.f32 %v72, %v74
    %77 = vrot.lane.b32.xlu0 %v70, 127
    %v78 = vpop.permute.xlu0 %77
    %v79 = vrot.slane %v57, 6
    %v81 = vmul.f32 %v78, %v79
    %83 = vset.pattern.permute.xlu0 0
    %84 = vperm.xlu0 %83, %v52
    %v85 = vpop.permute.xlu0 %84
    %88 = vset.pattern.permute.xlu0 0
    %89 = vperm.xlu0 %88, %v54
    %v90 = vpop.permute.xlu0 %89
    %v92 = vlaneseq
    %v93 = vshrl.u32 %v92, 7
    %v94 = vsub.s32 0, %v93
    %v95 = vrot.slane %v76, %v94
    %v96 = vmul.f32 %v85, %v95
    %v97 = vmul.f32 %v90, %v95
    %98 = vset.pattern.permute.xlu0 1
    %99 = vperm.xlu0 %98, %v52
    %v100 = vpop.permute.xlu0 %99
    %102 = vset.pattern.permute.xlu0 1
    %103 = vperm.xlu0 %102, %v54
    %v104 = vpop.permute.xlu0 %103
    %v107 = vlaneseq
    %v108 = vshrl.u32 %v107, 7
    %v109 = vsub.s32 0, %v108
    %v110 = vrot.slane %v70, %v109
    %v112 = vmul.f32 %v100, %v110
    %v113 = vmul.f32 %v104, %v110
    %v114 = vadd.f32 %v96, %v112
    %v115 = vadd.f32 %v97, %v113
    %116 = vset.pattern.permute.xlu0 2
    %117 = vperm.xlu0 %116, %v52
    %v118 = vpop.permute.xlu0 %117
    %120 = vset.pattern.permute.xlu0 2
    %121 = vperm.xlu0 %120, %v54
    %v122 = vpop.permute.xlu0 %121
    %v124 = vlaneseq
    %v125 = vshrl.u32 %v124, 7
    %v126 = vsub.s32 0, %v125
    %v127 = vrot.slane %v81, %v126
    %v128 = vmul.f32 %v118, %v127
    %v129 = vmul.f32 %v122, %v127
    %v130 = vadd.f32 %v114, %v128
    %v131 = vadd.f32 %v115, %v129
    %132 = vadd.xlane.f32.xlu0 %v130
    %v133 = vpop.xlane.xlu0 %132
    %134 = vadd.xlane.f32.xlu0 %v131
    %v135 = vpop.xlane.xlu0 %134
    %v136 = vmul.f32 %v130, %v130
    %v137 = vmul.f32 %v131, %v131
    %138 = vadd.xlane.f32.xlu0 %v136
    %v139 = vpop.xlane.xlu0 %138
    %140 = vadd.xlane.f32.xlu0 %v137
    %v141 = vpop.xlane.xlu0 %140
    %v142 = vmul.f32 %v133, 0.015625
    %v143 = vmul.f32 %v135, 0.015625
    %v144 = vmul.f32 %v139, 0.015625
    %v145 = vmul.f32 %v141, 0.015625
    %v146 = vmul.f32 %v142, %v142
    %v147 = vmul.f32 %v143, %v143
    %v148 = vsub.f32 %v144, %v146
    %v149 = vsub.f32 %v145, %v147
    %v150 = vadd.f32 %v148, 1e-05
    %v151 = vadd.f32 %v149, 1e-05
    %v152 = vrsqrt.pop %v150
    %v153 = vrsqrt.pop %v151
    %v154 = vmul.f32 %v53, %v152
    %v155 = vmul.f32 %v55, %v153
    %v156 = vmul.f32 %v142, %v154
    %v157 = vmul.f32 %v143, %v155
    %160 = vrot.lane.b32.xlu0 %v156, 1
    %v161 = vpop.permute.xlu0 %160
    %162 = vrot.lane.b32.xlu0 %v157, 1
    %v163 = vpop.permute.xlu0 %162
    %v166 = vsub.f32 %v53, %v161
    %v167 = vsub.f32 %v55, %v163
    %169 = vset.pattern.permute.xlu0 67
    %170 = vperm.xlu0 %169, %v154
    %v171 = vpop.permute.xlu0 %170
    %174 = vset.pattern.permute.xlu0 67
    %175 = vperm.xlu0 %174, %v155
    %v176 = vpop.permute.xlu0 %175
    %v178 = vmul.f32 %v130, %v171
    %v179 = vmul.f32 %v131, %v176
    %181 = vset.pattern.permute.xlu0 68
    %182 = vperm.xlu0 %181, %v166
    %v183 = vpop.permute.xlu0 %182
    %186 = vset.pattern.permute.xlu0 68
    %187 = vperm.xlu0 %186, %v167
    %v188 = vpop.permute.xlu0 %187
    %v190 = vadd.f32 %v178, %v183
    %v191 = vadd.f32 %v179, %v188
    %v192 = vmax.f32 %v190, 0.0
    %v193 = vmax.f32 %v191, 0.0
    %194 = vrot.lane.b32.xlu0 %v192, 1
    %v195 = vpop.permute.xlu0 %194
    %196 = vrot.lane.b32.xlu0 %v193, 1
    %v197 = vpop.permute.xlu0 %196
    %v198 = vmul.f32 %v195, %v61
    %v199 = vmul.f32 %v197, %v61
    %v200 = vmul.f32 %v192, %v65
    %v201 = vmul.f32 %v193, %v65
    %202 = vrot.lane.b32.xlu0 %v192, 127
    %v203 = vpop.permute.xlu0 %202
    %204 = vrot.lane.b32.xlu0 %v193, 127
    %v205 = vpop.permute.xlu0 %204
    %v206 = vmul.f32 %v203, %v69
    %v207 = vmul.f32 %v205, %v69
    %208 = vrot.lane.b32.xlu0 %v52, 125
    %v209 = vpop.permute.xlu0 %208
    %210 = vrot.lane.b32.xlu0 %v54, 125
    %v211 = vpop.permute.xlu0 %210
    %vm212 = vcmask 392192
    %v213 = vsel %vm212, %v209, 0
    %v215 = vsel %vm212, %v211, 0
    %217 = vmatprep.subr.mxu0 0.0
    %218 = vmatpush1.msra.mxu0 0.0
    %219 = vmatprep.subr.mxu0 0.0
    %220 = vmatpush1.msra.mxu0 0.0
    %221 = vmatprep.subr.mxu0 0.0
    %222 = vmatpush1.msra.mxu0 0.0
    %223 = vmatprep.subr.mxu0 0.0
    %224 = vmatpush1.msra.mxu0 0.0
    %225 = vmatprep.subr.mxu0 0.0
    %226 = vmatpush1.msra.mxu0 0.0
    %227 = vmatprep.subr.mxu0 0.0
    %228 = vmatpush1.msra.mxu0 0.0
    %229 = vmatprep.subr.mxu0 0.0
    %230 = vmatpush1.msra.mxu0 0.0
    %231 = vmatprep.subr.mxu0 0.0
    %232 = vmatpush1.msra.mxu0 0.0
    %233 = vmatprep.subr.mxu0 0.0
    %234 = vmatpush1.msra.mxu0 0.0
    %235 = vmatprep.subr.mxu0 0.0
    %236 = vmatpush1.msra.mxu0 0.0
    %237 = vmatprep.subr.mxu0 0.0
    %238 = vmatpush1.msra.mxu0 %v207
    %239 = vmatprep.subr.mxu0 0.0
    %240 = vmatpush1.msra.mxu0 %v206
    %241 = vmatprep.subr.mxu0 0.0
    %242 = vmatpush1.msra.mxu0 %v201
    %243 = vmatprep.subr.mxu0 0.0
    %244 = vmatpush1.msra.mxu0 %v200
    %245 = vmatprep.subr.mxu0 0.0
    %246 = vmatpush1.msra.mxu0 %v199
    %247 = vmatprep.subr.mxu0 0.0
    %248 = vmatpush1.msra.mxu0 %v198
    %249 = vmatprep.subr.mxu0 0.0
    %250 = vmatpush2.msra.mxu0 0.0
    %251 = vmatprep.subr.mxu0 0.0
    %252 = vmatpush2.msra.mxu0 0.0
    %253 = vmatprep.subr.mxu0 0.0
    %254 = vmatpush2.msra.mxu0 0.0
    %255 = vmatprep.subr.mxu0 0.0
    %256 = vmatpush2.msra.mxu0 0.0
    %257 = vmatprep.subr.mxu0 0.0
    %258 = vmatpush2.msra.mxu0 0.0
    %259 = vmatprep.subr.mxu0 0.0
    %260 = vmatpush2.msra.mxu0 0.0
    %261 = vmatprep.subr.mxu0 0.0
    %262 = vmatpush2.msra.mxu0 0.0
    %263 = vmatprep.subr.mxu0 0.0
    %264 = vmatpush2.msra.mxu0 0.0
    %265 = vmatprep.subr.mxu0 0.0
    %266 = vmatpush2.msra.mxu0 0.0
    %267 = vmatprep.subr.mxu0 0.0
    %268 = vmatpush2.msra.mxu0 0.0
    %269 = vmatprep.subr.mxu0 0.0
    %270 = vmatpush2.msra.mxu0 0.0
    %271 = vmatprep.subr.mxu0 0.0
    %272 = vmatpush2.msra.mxu0 0.0
    %273 = vmatprep.subr.mxu0 0.0
    %274 = vmatpush2.msra.mxu0 0.0
    %275 = vmatprep.subr.mxu0 0.0
    %276 = vmatpush2.msra.mxu0 0.0
    %277 = vmatprep.subr.mxu0 0.0
    %278 = vmatpush2.msra.mxu0 0.0
    %279 = vmatprep.subr.mxu0 0.0
    %280 = vmatpush2.msra.mxu0 0.0
    %281 = vmatprep.mubr.f32.mxu0 0.0
    %282 = vmatmul.mubr.f32.gmra.mxu0 %v213
    %v283 = vpop.f32.mrf.mxu0
    %v284 = vadd.f32 0.0, %v283
    %v285 = vpop.f32.mrf.mxu0
    %286 = vmatprep.mubr.f32.mxu0 0.0
    %287 = vmatmul.mubr.f32.gmra.mxu0 %v215
    %v288 = vpop.f32.mrf.mxu0
    %v289 = vadd.f32 0.0, %v288
    %v290 = vpop.f32.mrf.mxu0
    %291 = vdwg.mxu0
    %292 = vadd.xlane.f32.xlu0 %v284
    %v293 = vpop.xlane.xlu0 %292
    %294 = vadd.xlane.f32.xlu0 %v289
    %v295 = vpop.xlane.xlu0 %294
    %v296 = vmul.f32 %v284, %v284
    %v297 = vmul.f32 %v289, %v289
    %298 = vadd.xlane.f32.xlu0 %v296
    %v299 = vpop.xlane.xlu0 %298
    %300 = vadd.xlane.f32.xlu0 %v297
    %v301 = vpop.xlane.xlu0 %300
    %v302 = vmul.f32 %v293, 0.015625
    %v303 = vmul.f32 %v295, 0.015625
    %v304 = vmul.f32 %v299, 0.015625
    %v305 = vmul.f32 %v301, 0.015625
    %v306 = vmul.f32 %v302, %v302
    %v307 = vmul.f32 %v303, %v303
    %v308 = vsub.f32 %v304, %v306
    %v309 = vsub.f32 %v305, %v307
    %v310 = vadd.f32 %v308, 1e-05
    %v311 = vadd.f32 %v309, 1e-05
    %v312 = vrsqrt.pop %v310
    %v313 = vrsqrt.pop %v311
    %v314 = vmul.f32 %v53, %v312
    %v315 = vmul.f32 %v55, %v313
    %v316 = vmul.f32 %v302, %v314
    %v317 = vmul.f32 %v303, %v315
    %320 = vrot.lane.b32.xlu0 %v316, 1
    %v321 = vpop.permute.xlu0 %320
    %322 = vrot.lane.b32.xlu0 %v317, 1
    %v323 = vpop.permute.xlu0 %322
    %v326 = vsub.f32 %v53, %v321
    %v327 = vsub.f32 %v55, %v323
    %329 = vset.pattern.permute.xlu0 69
    %330 = vperm.xlu0 %329, %v314
    %v331 = vpop.permute.xlu0 %330
    %334 = vset.pattern.permute.xlu0 69
    %335 = vperm.xlu0 %334, %v315
    %v336 = vpop.permute.xlu0 %335
    %v338 = vmul.f32 %v284, %v331
    %v339 = vmul.f32 %v289, %v336
    %341 = vset.pattern.permute.xlu0 70
    %342 = vperm.xlu0 %341, %v326
    %v343 = vpop.permute.xlu0 %342
    %346 = vset.pattern.permute.xlu0 70
    %347 = vperm.xlu0 %346, %v327
    %v348 = vpop.permute.xlu0 %347
    %v350 = vadd.f32 %v338, %v343
    %v351 = vadd.f32 %v339, %v348
    %v352 = vmax.f32 %v350, 0.0
    %v353 = vmax.f32 %v351, 0.0
    %354 = vrot.lane.b32.xlu0 %v352, 1
    %v355 = vpop.permute.xlu0 %354
    %356 = vrot.lane.b32.xlu0 %v353, 1
    %v357 = vpop.permute.xlu0 %356
    %v358 = vmul.f32 %v355, %v61
    %v359 = vmul.f32 %v357, %v61
    %v360 = vmul.f32 %v352, %v65
    %v361 = vmul.f32 %v353, %v65
    %362 = vrot.lane.b32.xlu0 %v352, 127
    %v363 = vpop.permute.xlu0 %362
    %364 = vrot.lane.b32.xlu0 %v353, 127
    %v365 = vpop.permute.xlu0 %364
    %v366 = vmul.f32 %v363, %v69
    %v367 = vmul.f32 %v365, %v69
    %368 = vrot.lane.b32.xlu0 %v52, 77
    %v369 = vpop.permute.xlu0 %368
    %370 = vrot.lane.b32.xlu0 %v54, 77
    %v371 = vpop.permute.xlu0 %370
    %v372 = vsel %vm212, %v369, 0
    %v374 = vsel %vm212, %v371, 0
    %376 = vmatprep.subr.mxu0 0.0
    %377 = vmatpush1.msra.mxu0 0.0
    %378 = vmatprep.subr.mxu0 0.0
    %379 = vmatpush1.msra.mxu0 0.0
    %380 = vmatprep.subr.mxu0 0.0
    %381 = vmatpush1.msra.mxu0 0.0
    %382 = vmatprep.subr.mxu0 0.0
    %383 = vmatpush1.msra.mxu0 0.0
    %384 = vmatprep.subr.mxu0 0.0
    %385 = vmatpush1.msra.mxu0 0.0
    %386 = vmatprep.subr.mxu0 0.0
    %387 = vmatpush1.msra.mxu0 0.0
    %388 = vmatprep.subr.mxu0 0.0
    %389 = vmatpush1.msra.mxu0 0.0
    %390 = vmatprep.subr.mxu0 0.0
    %391 = vmatpush1.msra.mxu0 0.0
    %392 = vmatprep.subr.mxu0 0.0
    %393 = vmatpush1.msra.mxu0 0.0
    %394 = vmatprep.subr.mxu0 0.0
    %395 = vmatpush1.msra.mxu0 0.0
    %396 = vmatprep.subr.mxu0 0.0
    %397 = vmatpush1.msra.mxu0 %v367
    %398 = vmatprep.subr.mxu0 0.0
    %399 = vmatpush1.msra.mxu0 %v366
    %400 = vmatprep.subr.mxu0 0.0
    %401 = vmatpush1.msra.mxu0 %v361
    %402 = vmatprep.subr.mxu0 0.0
    %403 = vmatpush1.msra.mxu0 %v360
    %404 = vmatprep.subr.mxu0 0.0
    %405 = vmatpush1.msra.mxu0 %v359
    %406 = vmatprep.subr.mxu0 0.0
    %407 = vmatpush1.msra.mxu0 %v358
    %408 = vmatprep.subr.mxu0 0.0
    %409 = vmatpush2.msra.mxu0 0.0
    %410 = vmatprep.subr.mxu0 0.0
    %411 = vmatpush2.msra.mxu0 0.0
    %412 = vmatprep.subr.mxu0 0.0
    %413 = vmatpush2.msra.mxu0 0.0
    %414 = vmatprep.subr.mxu0 0.0
    %415 = vmatpush2.msra.mxu0 0.0
    %416 = vmatprep.subr.mxu0 0.0
    %417 = vmatpush2.msra.mxu0 0.0
    %418 = vmatprep.subr.mxu0 0.0
    %419 = vmatpush2.msra.mxu0 0.0
    %420 = vmatprep.subr.mxu0 0.0
    %421 = vmatpush2.msra.mxu0 0.0
    %422 = vmatprep.subr.mxu0 0.0
    %423 = vmatpush2.msra.mxu0 0.0
    %424 = vmatprep.subr.mxu0 0.0
    %425 = vmatpush2.msra.mxu0 0.0
    %426 = vmatprep.subr.mxu0 0.0
    %427 = vmatpush2.msra.mxu0 0.0
    %428 = vmatprep.subr.mxu0 0.0
    %429 = vmatpush2.msra.mxu0 0.0
    %430 = vmatprep.subr.mxu0 0.0
    %431 = vmatpush2.msra.mxu0 0.0
    %432 = vmatprep.subr.mxu0 0.0
    %433 = vmatpush2.msra.mxu0 0.0
    %434 = vmatprep.subr.mxu0 0.0
    %435 = vmatpush2.msra.mxu0 0.0
    %436 = vmatprep.subr.mxu0 0.0
    %437 = vmatpush2.msra.mxu0 0.0
    %438 = vmatprep.subr.mxu0 0.0
    %439 = vmatpush2.msra.mxu0 0.0
    %440 = vmatprep.mubr.f32.mxu0 0.0
    %441 = vmatmul.mubr.f32.gmra.mxu0 %v372
    %v442 = vpop.f32.mrf.mxu0
    %v443 = vadd.f32 0.0, %v442
    %v444 = vpop.f32.mrf.mxu0
    %445 = vmatprep.mubr.f32.mxu0 0.0
    %446 = vmatmul.mubr.f32.gmra.mxu0 %v374
    %v447 = vpop.f32.mrf.mxu0
    %v448 = vadd.f32 0.0, %v447
    %v449 = vpop.f32.mrf.mxu0
    %450 = vdwg.mxu0
    %451 = vadd.xlane.f32.xlu0 %v443
    %v452 = vpop.xlane.xlu0 %451
    %453 = vadd.xlane.f32.xlu0 %v448
    %v454 = vpop.xlane.xlu0 %453
    %v455 = vmul.f32 %v443, %v443
    %v456 = vmul.f32 %v448, %v448
    %457 = vadd.xlane.f32.xlu0 %v455
    %v458 = vpop.xlane.xlu0 %457
    %459 = vadd.xlane.f32.xlu0 %v456
    %v460 = vpop.xlane.xlu0 %459
    %v461 = vmul.f32 %v452, 0.015625
    %v462 = vmul.f32 %v454, 0.015625
    %v463 = vmul.f32 %v458, 0.015625
    %v464 = vmul.f32 %v460, 0.015625
    %v465 = vmul.f32 %v461, %v461
    %v466 = vmul.f32 %v462, %v462
    %v467 = vsub.f32 %v463, %v465
    %v468 = vsub.f32 %v464, %v466
    %v469 = vadd.f32 %v467, 1e-05
    %v470 = vadd.f32 %v468, 1e-05
    %v471 = vrsqrt.pop %v469
    %v472 = vrsqrt.pop %v470
    %v473 = vmul.f32 %v53, %v471
    %v474 = vmul.f32 %v55, %v472
    %v475 = vmul.f32 %v461, %v473
    %v476 = vmul.f32 %v462, %v474
    %479 = vrot.lane.b32.xlu0 %v475, 1
    %v480 = vpop.permute.xlu0 %479
    %481 = vrot.lane.b32.xlu0 %v476, 1
    %v482 = vpop.permute.xlu0 %481
    %v485 = vsub.f32 %v53, %v480
    %v486 = vsub.f32 %v55, %v482
    %488 = vset.pattern.permute.xlu0 71
    %489 = vperm.xlu0 %488, %v473
    %v490 = vpop.permute.xlu0 %489
    %493 = vset.pattern.permute.xlu0 71
    %494 = vperm.xlu0 %493, %v474
    %v495 = vpop.permute.xlu0 %494
    %v497 = vmul.f32 %v443, %v490
    %v498 = vmul.f32 %v448, %v495
    %500 = vset.pattern.permute.xlu0 72
    %501 = vperm.xlu0 %500, %v485
    %v502 = vpop.permute.xlu0 %501
    %505 = vset.pattern.permute.xlu0 72
    %506 = vperm.xlu0 %505, %v486
    %v507 = vpop.permute.xlu0 %506
    %v509 = vadd.f32 %v497, %v502
    %v510 = vadd.f32 %v498, %v507
    %v511 = vadd.f32 %v509, %v192
    %v512 = vadd.f32 %v510, %v193
    %v513 = vmax.f32 %v511, 0.0
    %v514 = vmax.f32 %v512, 0.0
    %515 = vrot.lane.b32.xlu0 %v513, 1
    %v516 = vpop.permute.xlu0 %515
    %517 = vrot.lane.b32.xlu0 %v514, 1
    %v518 = vpop.permute.xlu0 %517
    %v519 = vmul.f32 %v516, %v61
    %v520 = vmul.f32 %v518, %v61
    %v521 = vmul.f32 %v513, %v65
    %v522 = vmul.f32 %v514, %v65
    %523 = vrot.lane.b32.xlu0 %v513, 127
    %v524 = vpop.permute.xlu0 %523
    %525 = vrot.lane.b32.xlu0 %v514, 127
    %v526 = vpop.permute.xlu0 %525
    %v527 = vmul.f32 %v524, %v69
    %v528 = vmul.f32 %v526, %v69
    %531 = vrot.lane.b32.xlu0 %v52, 29
    %v532 = vpop.permute.xlu0 %531
    %533 = vrot.lane.b32.xlu0 %v53, 29
    %v534 = vpop.permute.xlu0 %533
    %535 = vrot.lane.b32.xlu0 %v54, 29
    %v536 = vpop.permute.xlu0 %535
    %537 = vrot.lane.b32.xlu0 %v55, 29
    %v538 = vpop.permute.xlu0 %537
    %vm539 = vcmask 236544
    %v540 = vsel %vm539, %v532, %v534
    %v541 = vsel %vm539, %v536, %v538
    %v542 = vsel %vm212, %v540, 0
    %v544 = vsel %vm212, %v541, 0
    %546 = vmatprep.subr.mxu0 0.0
    %547 = vmatpush1.msra.mxu0 0.0
    %548 = vmatprep.subr.mxu0 0.0
    %549 = vmatpush1.msra.mxu0 0.0
    %550 = vmatprep.subr.mxu0 0.0
    %551 = vmatpush1.msra.mxu0 0.0
    %552 = vmatprep.subr.mxu0 0.0
    %553 = vmatpush1.msra.mxu0 0.0
    %554 = vmatprep.subr.mxu0 0.0
    %555 = vmatpush1.msra.mxu0 0.0
    %556 = vmatprep.subr.mxu0 0.0
    %557 = vmatpush1.msra.mxu0 0.0
    %558 = vmatprep.subr.mxu0 0.0
    %559 = vmatpush1.msra.mxu0 0.0
    %560 = vmatprep.subr.mxu0 0.0
    %561 = vmatpush1.msra.mxu0 0.0
    %562 = vmatprep.subr.mxu0 0.0
    %563 = vmatpush1.msra.mxu0 0.0
    %564 = vmatprep.subr.mxu0 0.0
    %565 = vmatpush1.msra.mxu0 0.0
    %566 = vmatprep.subr.mxu0 0.0
    %567 = vmatpush1.msra.mxu0 %v528
    %568 = vmatprep.subr.mxu0 0.0
    %569 = vmatpush1.msra.mxu0 %v527
    %570 = vmatprep.subr.mxu0 0.0
    %571 = vmatpush1.msra.mxu0 %v522
    %572 = vmatprep.subr.mxu0 0.0
    %573 = vmatpush1.msra.mxu0 %v521
    %574 = vmatprep.subr.mxu0 0.0
    %575 = vmatpush1.msra.mxu0 %v520
    %576 = vmatprep.subr.mxu0 0.0
    %577 = vmatpush1.msra.mxu0 %v519
    %578 = vmatprep.subr.mxu0 0.0
    %579 = vmatpush2.msra.mxu0 0.0
    %580 = vmatprep.subr.mxu0 0.0
    %581 = vmatpush2.msra.mxu0 0.0
    %582 = vmatprep.subr.mxu0 0.0
    %583 = vmatpush2.msra.mxu0 0.0
    %584 = vmatprep.subr.mxu0 0.0
    %585 = vmatpush2.msra.mxu0 0.0
    %586 = vmatprep.subr.mxu0 0.0
    %587 = vmatpush2.msra.mxu0 0.0
    %588 = vmatprep.subr.mxu0 0.0
    %589 = vmatpush2.msra.mxu0 0.0
    %590 = vmatprep.subr.mxu0 0.0
    %591 = vmatpush2.msra.mxu0 0.0
    %592 = vmatprep.subr.mxu0 0.0
    %593 = vmatpush2.msra.mxu0 0.0
    %594 = vmatprep.subr.mxu0 0.0
    %595 = vmatpush2.msra.mxu0 0.0
    %596 = vmatprep.subr.mxu0 0.0
    %597 = vmatpush2.msra.mxu0 0.0
    %598 = vmatprep.subr.mxu0 0.0
    %599 = vmatpush2.msra.mxu0 0.0
    %600 = vmatprep.subr.mxu0 0.0
    %601 = vmatpush2.msra.mxu0 0.0
    %602 = vmatprep.subr.mxu0 0.0
    %603 = vmatpush2.msra.mxu0 0.0
    %604 = vmatprep.subr.mxu0 0.0
    %605 = vmatpush2.msra.mxu0 0.0
    %606 = vmatprep.subr.mxu0 0.0
    %607 = vmatpush2.msra.mxu0 0.0
    %608 = vmatprep.subr.mxu0 0.0
    %609 = vmatpush2.msra.mxu0 0.0
    %610 = vmatprep.mubr.f32.mxu0 0.0
    %611 = vmatmul.mubr.f32.gmra.mxu0 %v542
    %v612 = vpop.f32.mrf.mxu0
    %v613 = vadd.f32 0.0, %v612
    %v614 = vpop.f32.mrf.mxu0
    %615 = vmatprep.mubr.f32.mxu0 0.0
    %616 = vmatmul.mubr.f32.gmra.mxu0 %v544
    %v617 = vpop.f32.mrf.mxu0
    %v618 = vadd.f32 0.0, %v617
    %v619 = vpop.f32.mrf.mxu0
    %620 = vdwg.mxu0
    %621 = vadd.xlane.f32.xlu0 %v613
    %v622 = vpop.xlane.xlu0 %621
    %623 = vadd.xlane.f32.xlu0 %v618
    %v624 = vpop.xlane.xlu0 %623
    %v625 = vmul.f32 %v613, %v613
    %v626 = vmul.f32 %v618, %v618
    %627 = vadd.xlane.f32.xlu0 %v625
    %v628 = vpop.xlane.xlu0 %627
    %629 = vadd.xlane.f32.xlu0 %v626
    %v630 = vpop.xlane.xlu0 %629
    %v631 = vmul.f32 %v622, 0.015625
    %v632 = vmul.f32 %v624, 0.015625
    %v633 = vmul.f32 %v628, 0.015625
    %v634 = vmul.f32 %v630, 0.015625
    %v635 = vmul.f32 %v631, %v631
    %v636 = vmul.f32 %v632, %v632
    %v637 = vsub.f32 %v633, %v635
    %v638 = vsub.f32 %v634, %v636
    %v639 = vadd.f32 %v637, 1e-05
    %v640 = vadd.f32 %v638, 1e-05
    %v641 = vrsqrt.pop %v639
    %v642 = vrsqrt.pop %v640
    %v643 = vmul.f32 %v53, %v641
    %v644 = vmul.f32 %v55, %v642
    %v645 = vmul.f32 %v631, %v643
    %v646 = vmul.f32 %v632, %v644
    %649 = vrot.lane.b32.xlu0 %v645, 1
    %v650 = vpop.permute.xlu0 %649
    %651 = vrot.lane.b32.xlu0 %v646, 1
    %v652 = vpop.permute.xlu0 %651
    %v655 = vsub.f32 %v53, %v650
    %v656 = vsub.f32 %v55, %v652
    %658 = vset.pattern.permute.xlu0 73
    %659 = vperm.xlu0 %658, %v643
    %v660 = vpop.permute.xlu0 %659
    %663 = vset.pattern.permute.xlu0 73
    %664 = vperm.xlu0 %663, %v644
    %v665 = vpop.permute.xlu0 %664
    %v667 = vmul.f32 %v613, %v660
    %v668 = vmul.f32 %v618, %v665
    %670 = vset.pattern.permute.xlu0 74
    %671 = vperm.xlu0 %670, %v655
    %v672 = vpop.permute.xlu0 %671
    %675 = vset.pattern.permute.xlu0 74
    %676 = vperm.xlu0 %675, %v656
    %v677 = vpop.permute.xlu0 %676
    %v679 = vadd.f32 %v667, %v672
    %v680 = vadd.f32 %v668, %v677
    %v681 = vmax.f32 %v679, 0.0
    %v682 = vmax.f32 %v680, 0.0
    %683 = vrot.lane.b32.xlu0 %v681, 1
    %v684 = vpop.permute.xlu0 %683
    %685 = vrot.lane.b32.xlu0 %v682, 1
    %v686 = vpop.permute.xlu0 %685
    %v687 = vmul.f32 %v684, %v61
    %v688 = vmul.f32 %v686, %v61
    %v689 = vmul.f32 %v681, %v65
    %v690 = vmul.f32 %v682, %v65
    %691 = vrot.lane.b32.xlu0 %v681, 127
    %v692 = vpop.permute.xlu0 %691
    %693 = vrot.lane.b32.xlu0 %v682, 127
    %v694 = vpop.permute.xlu0 %693
    %v695 = vmul.f32 %v692, %v69
    %v696 = vmul.f32 %v694, %v69
    %697 = vrot.lane.b32.xlu0 %v53, 109
    %v698 = vpop.permute.xlu0 %697
    %699 = vrot.lane.b32.xlu0 %v55, 109
    %v700 = vpop.permute.xlu0 %699
    %v701 = vsel %vm212, %v698, 0
    %v703 = vsel %vm212, %v700, 0
    %705 = vmatprep.subr.mxu0 0.0
    %706 = vmatpush1.msra.mxu0 0.0
    %707 = vmatprep.subr.mxu0 0.0
    %708 = vmatpush1.msra.mxu0 0.0
    %709 = vmatprep.subr.mxu0 0.0
    %710 = vmatpush1.msra.mxu0 0.0
    %711 = vmatprep.subr.mxu0 0.0
    %712 = vmatpush1.msra.mxu0 0.0
    %713 = vmatprep.subr.mxu0 0.0
    %714 = vmatpush1.msra.mxu0 0.0
    %715 = vmatprep.subr.mxu0 0.0
    %716 = vmatpush1.msra.mxu0 0.0
    %717 = vmatprep.subr.mxu0 0.0
    %718 = vmatpush1.msra.mxu0 0.0
    %719 = vmatprep.subr.mxu0 0.0
    %720 = vmatpush1.msra.mxu0 0.0
    %721 = vmatprep.subr.mxu0 0.0
    %722 = vmatpush1.msra.mxu0 0.0
    %723 = vmatprep.subr.mxu0 0.0
    %724 = vmatpush1.msra.mxu0 0.0
    %725 = vmatprep.subr.mxu0 0.0
    %726 = vmatpush1.msra.mxu0 %v696
    %727 = vmatprep.subr.mxu0 0.0
    %728 = vmatpush1.msra.mxu0 %v695
    %729 = vmatprep.subr.mxu0 0.0
    %730 = vmatpush1.msra.mxu0 %v690
    %731 = vmatprep.subr.mxu0 0.0
    %732 = vmatpush1.msra.mxu0 %v689
    %733 = vmatprep.subr.mxu0 0.0
    %734 = vmatpush1.msra.mxu0 %v688
    %735 = vmatprep.subr.mxu0 0.0
    %736 = vmatpush1.msra.mxu0 %v687
    %737 = vmatprep.subr.mxu0 0.0
    %738 = vmatpush2.msra.mxu0 0.0
    %739 = vmatprep.subr.mxu0 0.0
    %740 = vmatpush2.msra.mxu0 0.0
    %741 = vmatprep.subr.mxu0 0.0
    %742 = vmatpush2.msra.mxu0 0.0
    %743 = vmatprep.subr.mxu0 0.0
    %744 = vmatpush2.msra.mxu0 0.0
    %745 = vmatprep.subr.mxu0 0.0
    %746 = vmatpush2.msra.mxu0 0.0
    %747 = vmatprep.subr.mxu0 0.0
    %748 = vmatpush2.msra.mxu0 0.0
    %749 = vmatprep.subr.mxu0 0.0
    %750 = vmatpush2.msra.mxu0 0.0
    %751 = vmatprep.subr.mxu0 0.0
    %752 = vmatpush2.msra.mxu0 0.0
    %753 = vmatprep.subr.mxu0 0.0
    %754 = vmatpush2.msra.mxu0 0.0
    %755 = vmatprep.subr.mxu0 0.0
    %756 = vmatpush2.msra.mxu0 0.0
    %757 = vmatprep.subr.mxu0 0.0
    %758 = vmatpush2.msra.mxu0 0.0
    %759 = vmatprep.subr.mxu0 0.0
    %760 = vmatpush2.msra.mxu0 0.0
    %761 = vmatprep.subr.mxu0 0.0
    %762 = vmatpush2.msra.mxu0 0.0
    %763 = vmatprep.subr.mxu0 0.0
    %764 = vmatpush2.msra.mxu0 0.0
    %765 = vmatprep.subr.mxu0 0.0
    %766 = vmatpush2.msra.mxu0 0.0
    %767 = vmatprep.subr.mxu0 0.0
    %768 = vmatpush2.msra.mxu0 0.0
    %769 = vmatprep.mubr.f32.mxu0 0.0
    %770 = vmatmul.mubr.f32.gmra.mxu0 %v701
    %v771 = vpop.f32.mrf.mxu0
    %v772 = vadd.f32 0.0, %v771
    %v773 = vpop.f32.mrf.mxu0
    %774 = vmatprep.mubr.f32.mxu0 0.0
    %775 = vmatmul.mubr.f32.gmra.mxu0 %v703
    %v776 = vpop.f32.mrf.mxu0
    %v777 = vadd.f32 0.0, %v776
    %v778 = vpop.f32.mrf.mxu0
    %779 = vdwg.mxu0
    %780 = vadd.xlane.f32.xlu0 %v772
    %v781 = vpop.xlane.xlu0 %780
    %782 = vadd.xlane.f32.xlu0 %v777
    %v783 = vpop.xlane.xlu0 %782
    %v784 = vmul.f32 %v772, %v772
    %v785 = vmul.f32 %v777, %v777
    %786 = vadd.xlane.f32.xlu0 %v784
    %v787 = vpop.xlane.xlu0 %786
    %788 = vadd.xlane.f32.xlu0 %v785
    %v789 = vpop.xlane.xlu0 %788
    %v790 = vmul.f32 %v781, 0.015625
    %v791 = vmul.f32 %v783, 0.015625
    %v792 = vmul.f32 %v787, 0.015625
    %v793 = vmul.f32 %v789, 0.015625
    %v794 = vmul.f32 %v790, %v790
    %v795 = vmul.f32 %v791, %v791
    %v796 = vsub.f32 %v792, %v794
    %v797 = vsub.f32 %v793, %v795
    %v798 = vadd.f32 %v796, 1e-05
    %v799 = vadd.f32 %v797, 1e-05
    %v800 = vrsqrt.pop %v798
    %v801 = vrsqrt.pop %v799
    %v802 = vmul.f32 %v53, %v800
    %v803 = vmul.f32 %v55, %v801
    %v804 = vmul.f32 %v790, %v802
    %v805 = vmul.f32 %v791, %v803
    %808 = vrot.lane.b32.xlu0 %v804, 1
    %v809 = vpop.permute.xlu0 %808
    %810 = vrot.lane.b32.xlu0 %v805, 1
    %v811 = vpop.permute.xlu0 %810
    %v814 = vsub.f32 %v53, %v809
    %v815 = vsub.f32 %v55, %v811
    %817 = vset.pattern.permute.xlu0 75
    %818 = vperm.xlu0 %817, %v802
    %v819 = vpop.permute.xlu0 %818
    %822 = vset.pattern.permute.xlu0 75
    %823 = vperm.xlu0 %822, %v803
    %v824 = vpop.permute.xlu0 %823
    %v826 = vmul.f32 %v772, %v819
    %v827 = vmul.f32 %v777, %v824
    %829 = vset.pattern.permute.xlu0 76
    %830 = vperm.xlu0 %829, %v814
    %v831 = vpop.permute.xlu0 %830
    %834 = vset.pattern.permute.xlu0 76
    %835 = vperm.xlu0 %834, %v815
    %v836 = vpop.permute.xlu0 %835
    %v838 = vadd.f32 %v826, %v831
    %v839 = vadd.f32 %v827, %v836
    %v840 = vadd.f32 %v838, %v513
    %v841 = vadd.f32 %v839, %v514
    %v842 = vmax.f32 %v840, 0.0
    %v843 = vmax.f32 %v841, 0.0
    %844 = vmatprep.subr.mxu0 0.0
    %845 = vmatpush1.xpose.msra.mxu0 0.0
    %846 = vmatprep.subr.mxu0 0.0
    %847 = vmatpush1.xpose.msra.mxu0 0.0
    %848 = vmatprep.subr.mxu0 0.0
    %849 = vmatpush1.xpose.msra.mxu0 0.0
    %850 = vmatprep.subr.mxu0 0.0
    %851 = vmatpush1.xpose.msra.mxu0 0.0
    %852 = vmatprep.subr.mxu0 0.0
    %853 = vmatpush1.xpose.msra.mxu0 0.0
    %854 = vmatprep.subr.mxu0 0.0
    %855 = vmatpush1.xpose.msra.mxu0 0.0
    %856 = vmatprep.subr.mxu0 0.0
    %857 = vmatpush1.xpose.msra.mxu0 0.0
    %858 = vmatprep.subr.mxu0 0.0
    %859 = vmatpush1.xpose.msra.mxu0 0.0
    %860 = vmatprep.subr.mxu0 0.0
    %861 = vmatpush1.xpose.msra.mxu0 0.0
    %862 = vmatprep.subr.mxu0 0.0
    %863 = vmatpush1.xpose.msra.mxu0 0.0
    %864 = vmatprep.subr.mxu0 0.0
    %865 = vmatpush1.xpose.msra.mxu0 0.0
    %866 = vmatprep.subr.mxu0 0.0
    %867 = vmatpush1.xpose.msra.mxu0 0.0
    %868 = vmatprep.subr.mxu0 0.0
    %869 = vmatpush1.xpose.msra.mxu0 0.0
    %870 = vmatprep.subr.mxu0 0.0
    %871 = vmatpush1.xpose.msra.mxu0 0.0
    %872 = vmatprep.subr.mxu0 0.0
    %873 = vmatpush1.xpose.msra.mxu0 %v843
    %874 = vmatprep.subr.mxu0 0.0
    %875 = vmatpush1.xpose.msra.mxu0 %v842
    %876 = vmatprep.subr.mxu0 0.0
    %877 = vmatpush2.xpose.msra.mxu0 0.0
    %878 = vmatprep.subr.mxu0 0.0
    %879 = vmatpush2.xpose.msra.mxu0 0.0
    %880 = vmatprep.subr.mxu0 0.0
    %881 = vmatpush2.xpose.msra.mxu0 0.0
    %882 = vmatprep.subr.mxu0 0.0
    %883 = vmatpush2.xpose.msra.mxu0 0.0
    %884 = vmatprep.subr.mxu0 0.0
    %885 = vmatpush2.xpose.msra.mxu0 0.0
    %886 = vmatprep.subr.mxu0 0.0
    %887 = vmatpush2.xpose.msra.mxu0 0.0
    %888 = vmatprep.subr.mxu0 0.0
    %889 = vmatpush2.xpose.msra.mxu0 0.0
    %890 = vmatprep.subr.mxu0 0.0
    %891 = vmatpush2.xpose.msra.mxu0 0.0
    %892 = vmatprep.subr.mxu0 0.0
    %893 = vmatpush2.xpose.msra.mxu0 0.0
    %894 = vmatprep.subr.mxu0 0.0
    %895 = vmatpush2.xpose.msra.mxu0 0.0
    %896 = vmatprep.subr.mxu0 0.0
    %897 = vmatpush2.xpose.msra.mxu0 0.0
    %898 = vmatprep.subr.mxu0 0.0
    %899 = vmatpush2.xpose.msra.mxu0 0.0
    %900 = vmatprep.subr.mxu0 0.0
    %901 = vmatpush2.xpose.msra.mxu0 0.0
    %902 = vmatprep.subr.mxu0 0.0
    %903 = vmatpush2.xpose.msra.mxu0 0.0
    %904 = vmatprep.subr.mxu0 0.0
    %905 = vmatpush2.xpose.msra.mxu0 0.0
    %906 = vmatprep.subr.mxu0 0.0
    %907 = vmatpush2.xpose.msra.mxu0 0.0
    %908 = vmatprep.mubr.f32.mxu0 0.0
    %909 = vmatmul.mubr.f32.gmra.mxu0 %v57
    %v910 = vpop.f32.mrf.mxu0
    %v911 = vadd.f32 0.0, %v910
    %v912 = vpop.f32.mrf.mxu0
    %913 = vdwg.mxu0
    %v914 = vlaneseq
    %v915 = vshrl.u32 %v914, 7
    %v916 = vsub.s32 0, %v915
    %v917 = vrot.slane %v56, %v916
    %918 = vrot.lane.b32.xlu0 %v53, 51
    %v919 = vpop.permute.xlu0 %918
    %920 = vrot.lane.b32.xlu0 %v55, 51
    %v921 = vpop.permute.xlu0 %920
    %925 = vrot.lane.b32.xlu0 %v917, 51
    %v926 = vpop.permute.xlu0 %925
    %vm928 = vcmask 130048
    %v930 = vsel %vm928, %v911, 0
    %932 = vmatprep.subr.mxu0 0.0
    %933 = vmatpush1.msra.mxu0 0.0
    %934 = vmatprep.subr.mxu0 0.0
    %935 = vmatpush1.msra.mxu0 0.0
    %936 = vmatprep.subr.mxu0 0.0
    %937 = vmatpush1.msra.mxu0 0.0
    %938 = vmatprep.subr.mxu0 0.0
    %939 = vmatpush1.msra.mxu0 0.0
    %940 = vmatprep.subr.mxu0 0.0
    %941 = vmatpush1.msra.mxu0 0.0
    %942 = vmatprep.subr.mxu0 0.0
    %943 = vmatpush1.msra.mxu0 0.0
    %944 = vmatprep.subr.mxu0 0.0
    %945 = vmatpush1.msra.mxu0 0.0
    %946 = vmatprep.subr.mxu0 0.0
    %947 = vmatpush1.msra.mxu0 0.0
    %948 = vmatprep.subr.mxu0 0.0
    %949 = vmatpush1.msra.mxu0 0.0
    %950 = vmatprep.subr.mxu0 0.0
    %951 = vmatpush1.msra.mxu0 0.0
    %952 = vmatprep.subr.mxu0 0.0
    %953 = vmatpush1.msra.mxu0 0.0
    %954 = vmatprep.subr.mxu0 0.0
    %955 = vmatpush1.msra.mxu0 0.0
    %956 = vmatprep.subr.mxu0 0.0
    %957 = vmatpush1.msra.mxu0 0.0
    %958 = vmatprep.subr.mxu0 0.0
    %959 = vmatpush1.msra.mxu0 0.0
    %960 = vmatprep.subr.mxu0 0.0
    %961 = vmatpush1.msra.mxu0 %v921
    %962 = vmatprep.subr.mxu0 0.0
    %963 = vmatpush1.msra.mxu0 %v919
    %964 = vmatprep.subr.mxu0 0.0
    %965 = vmatpush2.msra.mxu0 0.0
    %966 = vmatprep.subr.mxu0 0.0
    %967 = vmatpush2.msra.mxu0 0.0
    %968 = vmatprep.subr.mxu0 0.0
    %969 = vmatpush2.msra.mxu0 0.0
    %970 = vmatprep.subr.mxu0 0.0
    %971 = vmatpush2.msra.mxu0 0.0
    %972 = vmatprep.subr.mxu0 0.0
    %973 = vmatpush2.msra.mxu0 0.0
    %974 = vmatprep.subr.mxu0 0.0
    %975 = vmatpush2.msra.mxu0 0.0
    %976 = vmatprep.subr.mxu0 0.0
    %977 = vmatpush2.msra.mxu0 0.0
    %978 = vmatprep.subr.mxu0 0.0
    %979 = vmatpush2.msra.mxu0 0.0
    %980 = vmatprep.subr.mxu0 0.0
    %981 = vmatpush2.msra.mxu0 0.0
    %982 = vmatprep.subr.mxu0 0.0
    %983 = vmatpush2.msra.mxu0 0.0
    %984 = vmatprep.subr.mxu0 0.0
    %985 = vmatpush2.msra.mxu0 0.0
    %986 = vmatprep.subr.mxu0 0.0
    %987 = vmatpush2.msra.mxu0 0.0
    %988 = vmatprep.subr.mxu0 0.0
    %989 = vmatpush2.msra.mxu0 0.0
    %990 = vmatprep.subr.mxu0 0.0
    %991 = vmatpush2.msra.mxu0 0.0
    %992 = vmatprep.subr.mxu0 0.0
    %993 = vmatpush2.msra.mxu0 0.0
    %994 = vmatprep.subr.mxu0 0.0
    %995 = vmatpush2.msra.mxu0 0.0
    %996 = vmatprep.mubr.f32.mxu0 0.0
    %997 = vmatmul.mubr.f32.gmra.mxu0 %v930
    %v998 = vpop.f32.mrf.mxu0
    %v999 = vadd.f32 %v926, %v998
    %v1000 = vpop.f32.mrf.mxu0
    %1001 = vdwg.mxu0
    %vm1002 = vcmask 125952
    %1003 = vst.msk [vmem:[#allocation8] sm:$0xf] %vm1002, %v999
    // Predicated region
    $region26: #{tpu_custom_call.1} parent=1 // pred_check
      _
    $region27: #{tpu_custom_call.1} parent=1 // pred_check_branch
      %1005 = sbr.rel (0) target = $region29
    $region28: #{tpu_custom_call.1} parent=1 // pred_region
      %s1007 = ssub.s32 64, 64
      %1008 = vsyncadd [#allocation4], %s1007
      %s1010 = sshll.u32 [#allocation8], 4
      %s1011 = int_to_ptr.vmem [resolvable:$true] %s1010
      %1013 = dma.vmem_to_hbm [thread:$0]  %s1011, 64, %s3, [#allocation4]
    $region29: #{tpu_custom_call.1} parent=1 // pred_fallthru
      _
    // Predicated region
    $region30: #{tpu_custom_call.1} parent=1 // pred_check
      _
    $region31: #{tpu_custom_call.1} parent=1 // pred_check_branch
      %1015 = sbr.rel (0) target = $region33
    $region32: #{tpu_custom_call.1} parent=1 // pred_region
      %1016 = dma.done [#allocation4], 64
    $region33: #{tpu_custom_call.1} parent=1 // pred_fallthru
      _
    %1017 = vsyncpa [#allocation3], 1
    %1018 = vsyncpa [#allocation6], 1
    %1019 = vsyncpa [#allocation4], 1

</llo_original>
